<compile_context>
chip_gen: v7x
topology: tpu7x:2x2x1
jax: 0.10.0
libtpu: 0.0.40
codegen_flags: <defaults>
</compile_context>

<pallas_src>
import jax
import jax.numpy as jnp
import numpy as np
from jax.experimental import pallas as pl
from jax.experimental.pallas import tpu as pltpu


def _log_sigmoid(x):
    # numerically stable log(sigmoid(x)) = min(x, 0) - log1p(exp(-|x|))
    return jnp.minimum(x, 0.0) - jnp.log1p(jnp.exp(-jnp.abs(x)))


def _neg_sampling_kernel(c_ref, ov_ref, oidx_ref, negf_ref, out_ref):
    # c_ref:    (TB, D)      f32  center embeddings for this batch tile
    # ov_ref:   (N,  D)      f32  full outside-vector table (same block every step)
    # oidx_ref: (TB, W, 1)   i32  outside-word indices (PAD positions pre-mapped to -1)
    # negf_ref: (TB, W*K, 1) i32  negative indices (negatives of PAD positions -> -1)
    # out_ref:  (TB, 128)    f32  per-batch loss broadcast across lanes (lane-dense store)
    c = c_ref[...]                                   # (TB, D)
    ov = ov_ref[...]                                 # (N, D)

    # MXU: vec_dots[b, n] = <center[b], outside[n]>  (torch-reference full-matmul form)
    vec_dots = jax.lax.dot_general(
        c, ov, dimension_numbers=(((1,), (1,)), ((), ())),
        precision=jax.lax.Precision.HIGHEST,         # HIGH (bf16_3x) is an option if N/D grow
        preferred_element_type=jnp.float32)           # (TB, N)
    N = vec_dots.shape[-1]

    # Gather-free "gather": per-vocab occurrence counts (duplicates counted multiply),
    # vectorized over the index axis.  PAD-related indices were sanitized to -1 in the
    # wrapper, so they never match the iota and fall out of the counts automatically.
    iota = jax.lax.broadcasted_iota(jnp.int32, (1, 1, N), 2)                # (1, 1, N)
    cnt_pos = jnp.sum((oidx_ref[...] == iota).astype(jnp.int32), axis=1)    # (TB, N) i32
    cnt_neg = jnp.sum((negf_ref[...] == iota).astype(jnp.int32), axis=1)    # (TB, N) i32

    # logsigmoid deferred until after counting; fused finalize:
    #   front - back = sum_n [ cnt_neg*dots - (cnt_pos + cnt_neg)*logsigmoid(dots) ]
    # (uses logsigmoid(-x) = logsigmoid(x) - x, so only one EUP pass over (TB, N)).
    ls = _log_sigmoid(vec_dots)                                             # (TB, N)
    cpos = cnt_pos.astype(jnp.float32)
    cneg = cnt_neg.astype(jnp.float32)
    loss = jnp.sum(cneg * vec_dots - (cpos + cneg) * ls,
                   axis=-1, keepdims=True)                                  # (TB, 1)

    # Lane-dense store; wrapper slices column 0.
    out_ref[...] = jnp.broadcast_to(loss, out_ref.shape)


def neg_sampling_loss_pallas(center_vectors, outside_vectors,
                             center_word_index, outside_word_indices,
                             negative_samples):
    N, D = outside_vectors.shape
    B, W = outside_word_indices.shape
    K = negative_samples.shape[-1]

    oidx = outside_word_indices.astype(jnp.int32)              # (B, W)
    neg = negative_samples.astype(jnp.int32)                   # (B, W, K)

    # One-time sanitization (opt #1): remove PAD context positions from the counts by
    # remapping that position's context index AND its K negatives to -1.  Negatives that
    # are index 0 at non-PAD positions are left untouched (reference gathers them).
    pad_pos = oidx == 0
    oidx_s = jnp.where(pad_pos, -1, oidx)                      # (B, W)
    negf = jnp.where(pad_pos[:, :, None], -1, neg).reshape(B, W * K)

    # Batch tile: blocks need TB % 8 == 0 or TB == full batch.  Keep >= 2 grid steps
    # whenever B allows so the "parallel" axis can shard across v7x's two TensorCores;
    # the 128 cap can be swept toward 256 on v5e/v6e to amortize per-step overhead.
    if B <= 8:
        TB = B
    else:
        TB = min(128, (B // 8) * 8)
        if -(-B // TB) < 2:
            TB = max(8, ((B // 2) // 8) * 8)
    B_pad = -(-B // TB) * TB

    cwi = center_word_index.astype(jnp.int32)
    if B_pad != B:
        pad = B_pad - B
        cwi = jnp.pad(cwi, (0, pad))
        oidx_s = jnp.pad(oidx_s, ((0, pad), (0, 0)), constant_values=-1)   # padded rows -> no counts
        negf = jnp.pad(negf, ((0, pad), (0, 0)), constant_values=-1)

    # Only the tiny (B, D) center-row gather stays on the XLA side; the big embedding
    # gathers are done in-kernel via MXU + one-hot counting.
    c_emb = jnp.take(center_vectors.astype(jnp.float32), cwi, axis=0)      # (B_pad, D)
    ov = outside_vectors.astype(jnp.float32)

    # Pass index arrays pre-shaped (B_pad, J, 1) so the kernel's lane-broadcast compare
    # needs no in-kernel relayout.
    oidx3 = oidx_s[:, :, None]                                             # (B_pad, W, 1)
    negf3 = negf[:, :, None]                                               # (B_pad, W*K, 1)

    out = pl.pallas_call(
        _neg_sampling_kernel,
        out_shape=jax.ShapeDtypeStruct((B_pad, 128), jnp.float32),
        grid=(B_pad // TB,),
        in_specs=[
            pl.BlockSpec((TB, D), lambda i: (i, 0)),            # center embeddings (tiled)
            pl.BlockSpec((N, D), lambda i: (0, 0)),             # full table (block reused)
            pl.BlockSpec((TB, W, 1), lambda i: (i, 0, 0)),      # context indices
            pl.BlockSpec((TB, W * K, 1), lambda i: (i, 0, 0)),  # negative indices
        ],
        out_specs=pl.BlockSpec((TB, 128), lambda i: (i, 0)),
        compiler_params=pltpu.CompilerParams(
            dimension_semantics=("parallel",),                  # megacore-shardable batch axis
        ),
    )(c_emb, ov, oidx3, negf3)
    return out[:B, 0]                                           # (B,)


def neg_sampling_loss_ref(center_vectors, outside_vectors,
                          center_word_index, outside_word_indices,
                          negative_samples):
    """Pure-JAX mirror of the torch reference (full matmul + gathers)."""
    B, W = outside_word_indices.shape
    K = negative_samples.shape[-1]
    centers = center_vectors[center_word_index]                         # (B, D)
    vec_dots = jnp.einsum('nd,bd->bn', outside_vectors, centers,
                          precision=jax.lax.Precision.HIGHEST)          # (B, N)
    front = -jax.nn.log_sigmoid(
        jnp.take_along_axis(vec_dots, outside_word_indices, axis=1))    # (B, W)
    tmp = negative_samples.reshape(B, -1)                               # (B, W*K)
    back = jax.nn.log_sigmoid(
        -jnp.take_along_axis(vec_dots, tmp, axis=1)).reshape(B, W, K).sum(-1)
    losses = front - back
    losses = jnp.where(outside_word_indices == 0, 0.0, losses)
    return losses.sum(axis=1)


if __name__ == "__main__":
    n_tokens, word_dim = 64, 32       # Word2Vec.__init__ parameter shapes
    B, W, K = 2, 8, 10                # batch, outside-window size, negatives

    key = jax.random.PRNGKey(0)
    k1, k2, k3, k4, k5 = jax.random.split(key, 5)

    # deterministic stand-in for torch.nn.init.normal_ of the two embedding tables
    center_vectors = jax.random.normal(k1, (n_tokens, word_dim), dtype=jnp.float32)
    outside_vectors = jax.random.normal(k2, (n_tokens, word_dim), dtype=jnp.float32)

    center_word_index = jax.random.randint(k3, (B,), 1, n_tokens, dtype=jnp.int32)
    outside_word_indices = jax.random.randint(k4, (B, W), 1, n_tokens, dtype=jnp.int32)
    # insert some <PAD> (index 0) tokens to exercise the masking path
    outside_word_indices = outside_word_indices.at[0, -2:].set(0)
    outside_word_indices = outside_word_indices.at[1, -1:].set(0)

    # TODO(synk): SkipgramDataset.negative_sampler is external/data-dependent;
    # replaced with a deterministic uniform draw of K negatives per context word
    # (lower bound 0 so the "legitimate index-0 negative" path is exercised too).
    negative_samples = jax.random.randint(k5, (B, W, K), 0, n_tokens, dtype=jnp.int32)

    loss = neg_sampling_loss_pallas(center_vectors, outside_vectors,
                                    center_word_index, outside_word_indices,
                                    negative_samples)
    loss = jax.block_until_ready(loss)

    ref = neg_sampling_loss_ref(center_vectors, outside_vectors,
                                center_word_index, outside_word_indices,
                                negative_samples)
    np.testing.assert_allclose(np.asarray(loss), np.asarray(ref), rtol=1e-5, atol=1e-4)
    print("KERNEL_OK")
</pallas_src>

<mosaic_0001>
module attributes {stable_mosaic.version = 11 : i64} {
  func.func @_neg_sampling_kernel(%arg0: i32, %arg1: memref<2x32xf32, #tpu.memory_space<vmem>>, %arg2: memref<64x32xf32, #tpu.memory_space<vmem>>, %arg3: memref<2x8x1xi32, #tpu.memory_space<vmem>>, %arg4: memref<2x80x1xi32, #tpu.memory_space<vmem>>, %arg5: memref<2x128xf32, #tpu.memory_space<vmem>>) attributes {dimension_semantics = [#tpu.dimension_semantics<parallel>], iteration_bounds = array<i64: 1>, scalar_prefetch = 0 : i64, scratch_operands = 0 : i64, tpu.core_type = #tpu.core_type<tc>, window_params = [{transform_indices = @transform_0, window_bounds = array<i64: 2, 32>}, {pipeline_mode = #tpu.pipeline_mode<synchronous>, transform_indices = @transform_1, window_bounds = array<i64: 64, 32>}, {transform_indices = @transform_2, window_bounds = array<i64: 2, 8, 1>}, {transform_indices = @transform_3, window_bounds = array<i64: 2, 80, 1>}, {transform_indices = @transform_4, window_bounds = array<i64: 2, 128>}]} {
    %c0 = arith.constant 0 : index
    %c0_0 = arith.constant 0 : index
    %0 = vector.load %arg1[%c0, %c0_0] : memref<2x32xf32, #tpu.memory_space<vmem>>, vector<2x32xf32>
    %c0_1 = arith.constant 0 : index
    %c0_2 = arith.constant 0 : index
    %1 = vector.load %arg2[%c0_1, %c0_2] : memref<64x32xf32, #tpu.memory_space<vmem>>, vector<64x32xf32>
    %cst = arith.constant dense<0.000000e+00> : vector<2x64xf32>
    %2 = tpu.matmul %0, %1, %cst {dimension_numbers = #tpu.dot_dimension_numbers<[1], [1], [0], [0], [0, 0, 1, 0], [], []>, precision = #tpu.contract_precision<fp32>} : vector<2x32xf32>, vector<64x32xf32>, vector<2x64xf32> -> vector<2x64xf32>
    %3 = tpu.iota {dimensions = array<i32: 2>} : vector<1x1x64xi32>
    %c0_3 = arith.constant 0 : index
    %c0_4 = arith.constant 0 : index
    %c0_5 = arith.constant 0 : index
    %4 = vector.load %arg3[%c0_3, %c0_4, %c0_5] : memref<2x8x1xi32, #tpu.memory_space<vmem>>, vector<2x8x1xi32>
    %5 = vector.broadcast %4 : vector<2x8x1xi32> to vector<2x8x64xi32>
    %6 = vector.broadcast %3 : vector<1x1x64xi32> to vector<2x8x64xi32>
    %7 = arith.cmpi eq, %5, %6 : vector<2x8x64xi32>
    %8 = arith.extui %7 : vector<2x8x64xi1> to vector<2x8x64xi32>
    %cst_6 = arith.constant dense<0> : vector<2x64xi32>
    %9 = vector.multi_reduction <add>, %8, %cst_6 [1] : vector<2x8x64xi32> to vector<2x64xi32>
    %c0_7 = arith.constant 0 : index
    %c0_8 = arith.constant 0 : index
    %c0_9 = arith.constant 0 : index
    %10 = vector.load %arg4[%c0_7, %c0_8, %c0_9] : memref<2x80x1xi32, #tpu.memory_space<vmem>>, vector<2x80x1xi32>
    %11 = vector.broadcast %10 : vector<2x80x1xi32> to vector<2x80x64xi32>
    %12 = vector.broadcast %3 : vector<1x1x64xi32> to vector<2x80x64xi32>
    %13 = arith.cmpi eq, %11, %12 : vector<2x80x64xi32>
    %14 = arith.extui %13 : vector<2x80x64xi1> to vector<2x80x64xi32>
    %cst_10 = arith.constant dense<0> : vector<2x64xi32>
    %15 = vector.multi_reduction <add>, %14, %cst_10 [1] : vector<2x80x64xi32> to vector<2x64xi32>
    %cst_11 = arith.constant 0.000000e+00 : f32
    %16 = vector.broadcast %cst_11 : f32 to vector<2x64xf32>
    %17 = arith.minimumf %2, %16 : vector<2x64xf32>
    %18 = math.absf %2 : vector<2x64xf32>
    %cst_12 = arith.constant 0.000000e+00 : f32
    %19 = vector.broadcast %cst_12 : f32 to vector<2x64xf32>
    %20 = arith.subf %19, %18 : vector<2x64xf32>
    %21 = math.exp %20 : vector<2x64xf32>
    %22 = math.log1p %21 : vector<2x64xf32>
    %23 = arith.subf %17, %22 : vector<2x64xf32>
    %24 = arith.sitofp %9 : vector<2x64xi32> to vector<2x64xf32>
    %25 = arith.sitofp %15 : vector<2x64xi32> to vector<2x64xf32>
    %26 = arith.mulf %25, %2 : vector<2x64xf32>
    %27 = arith.addf %24, %25 : vector<2x64xf32>
    %28 = arith.mulf %27, %23 : vector<2x64xf32>
    %29 = arith.subf %26, %28 : vector<2x64xf32>
    %cst_13 = arith.constant dense<0.000000e+00> : vector<2xf32>
    %30 = vector.multi_reduction <add>, %29, %cst_13 [1] : vector<2x64xf32> to vector<2xf32>
    %31 = vector.shape_cast %30 : vector<2xf32> to vector<2x1xf32>
    %32 = vector.shape_cast %31 : vector<2x1xf32> to vector<2x1xf32>
    %33 = vector.broadcast %32 : vector<2x1xf32> to vector<2x128xf32>
    %c0_14 = arith.constant 0 : index
    %c0_15 = arith.constant 0 : index
    %34 = vector.load %arg5[%c0_14, %c0_15] : memref<2x128xf32, #tpu.memory_space<vmem>>, vector<2x128xf32>
    tpu.vector_store %arg5[%c0_14, %c0_15], %33 {strides = array<i32>} : memref<2x128xf32, #tpu.memory_space<vmem>>, vector<2x128xf32>,
    return
  }
  func.func @transform_0(%arg0: i32) -> (i32, i32) {
    %c0_i32 = arith.constant 0 : i32
    %c0_i32_0 = arith.constant 0 : i32
    return %arg0, %c0_i32 : i32, i32
  }
  func.func @transform_1(%arg0: i32) -> (i32, i32) {
    %c0_i32 = arith.constant 0 : i32
    %c0_i32_0 = arith.constant 0 : i32
    %c0_i32_1 = arith.constant 0 : i32
    return %c0_i32, %c0_i32_0 : i32, i32
  }
  func.func @transform_2(%arg0: i32) -> (i32, i32, i32) {
    %c0_i32 = arith.constant 0 : i32
    %c0_i32_0 = arith.constant 0 : i32
    %c0_i32_1 = arith.constant 0 : i32
    return %arg0, %c0_i32, %c0_i32_0 : i32, i32, i32
  }
  func.func @transform_3(%arg0: i32) -> (i32, i32, i32) {
    %c0_i32 = arith.constant 0 : i32
    %c0_i32_0 = arith.constant 0 : i32
    %c0_i32_1 = arith.constant 0 : i32
    return %arg0, %c0_i32, %c0_i32_0 : i32, i32, i32
  }
  func.func @transform_4(%arg0: i32) -> (i32, i32) {
    %c0_i32 = arith.constant 0 : i32
    %c0_i32_0 = arith.constant 0 : i32
    return %arg0, %c0_i32 : i32, i32
  }
}

</mosaic_0001>

<llo_original>
// kernel: tpu_custom_call.1
$region0: #{tpu_custom_call.1}
  #allocation0 [shape = 'u32[]', space=smem, size = 0x4, offset = 0x4, fixed_abs, tag = 'smem constant byte address 0x4 - core index']
  #allocation1 [shape = 'u32[144,128]{1,0:T(1,128)}', space=vmem, size = 0x12000, scoped, tag = 'internal scratch']
  %s0 = inlined_call_operand.vmem [shape: f32[2,32], index: 0, kind: input, shape index: {}]
  %s1 = inlined_call_operand.vmem [shape: f32[64,32], index: 1, kind: input, shape index: {}]
  %s2 = inlined_call_operand.vmem [shape: s32[2,8,1], index: 2, kind: input, shape index: {}]
  %s3 = inlined_call_operand.vmem [shape: s32[2,80,1], index: 3, kind: input, shape index: {}]
  %s4 = inlined_call_operand.hbm [shape: f32[2,128], index: 4, kind: output, shape index: {}]
  %s5 = sld [smem:[#allocation0]]
  $region26: #{tpu_custom_call.1} parent=0
    _
  %s7 = ssub.s32 1, %s5
  %s8 = scalar_select 0, %s7, %s5
  $region1: #{tpu_custom_call.1} parent=0
    #allocation2 [shape = 'u8[1024]{0}', space=vmem, size = 0x400, scoped, tag = 'output window, operand 0, single buffered']
    #allocation3 [shape = 's32[1]{0}', space=sflag, size = 0x4, scoped, tag = 'scoped memory for tpu_custom_call.1']
    %9 = vsyncpa [#allocation3], 0
    // Predicated region
    $region2: #{tpu_custom_call.1} parent=1 // pred_check
      _
    $region3: #{tpu_custom_call.1} parent=1 // pred_check_branch
      %11 = sbr.rel (0) target = $region5
    $region4: #{tpu_custom_call.1} parent=1 // pred_region
      _
    $region5: #{tpu_custom_call.1} parent=1 // pred_fallthru
      _
    // Predicated region
    $region6: #{tpu_custom_call.1} parent=1 // pred_check
      _
    $region7: #{tpu_custom_call.1} parent=1 // pred_check_branch
      %13 = sbr.rel (0) target = $region9
    $region8: #{tpu_custom_call.1} parent=1 // pred_region
      _
    $region9: #{tpu_custom_call.1} parent=1 // pred_fallthru
      _
    // Predicated region
    $region10: #{tpu_custom_call.1} parent=1 // pred_check
      _
    $region11: #{tpu_custom_call.1} parent=1 // pred_check_branch
      %15 = sbr.rel (0) target = $region13
    $region12: #{tpu_custom_call.1} parent=1 // pred_region
      _
    $region13: #{tpu_custom_call.1} parent=1 // pred_fallthru
      _
    // Predicated region
    $region14: #{tpu_custom_call.1} parent=1 // pred_check
      _
    $region15: #{tpu_custom_call.1} parent=1 // pred_check_branch
      %17 = sbr.rel (0) target = $region17
    $region16: #{tpu_custom_call.1} parent=1 // pred_region
      _
    $region17: #{tpu_custom_call.1} parent=1 // pred_fallthru
      _
    %v18 = vld [vmem:[%s0] sm:$0x3]
    %v19 = vld [vmem:[%s1] sm:$0xff]
    %v20 = vld [vmem:[%s1 + $0x8] sm:$0xff]
    %v21 = vld [vmem:[%s1 + $0x10] sm:$0xff]
    %v22 = vld [vmem:[%s1 + $0x18] sm:$0xff]
    %v23 = vld [vmem:[%s1 + $0x20] sm:$0xff]
    %v24 = vld [vmem:[%s1 + $0x28] sm:$0xff]
    %v25 = vld [vmem:[%s1 + $0x30] sm:$0xff]
    %v26 = vld [vmem:[%s1 + $0x38] sm:$0xff]
    %vm27 = vcmask 261120
    %v29 = vsel %vm27, %v18, 0
    %v32 = vsel %vm27, %v19, 0
    %v35 = vsel %vm27, %v20, 0
    %v38 = vsel %vm27, %v21, 0
    %v41 = vsel %vm27, %v22, 0
    %v44 = vsel %vm27, %v23, 0
    %v47 = vsel %vm27, %v24, 0
    %v50 = vsel %vm27, %v25, 0
    %v53 = vsel %vm27, %v26, 0
    %55 = vmatprep.subr.mxu0 0.0
    %v56 = vand.u32 %v32, 4294901760
    %57 = vmatpush1.xpose.msra.mxu0 %v56
    %58 = vmatprep.subr.mxu0 0.0
    %v59 = vand.u32 %v35, 4294901760
    %60 = vmatpush1.xpose.msra.mxu0 %v59
    %61 = vmatprep.subr.mxu0 0.0
    %v62 = vand.u32 %v38, 4294901760
    %63 = vmatpush1.xpose.msra.mxu0 %v62
    %64 = vmatprep.subr.mxu0 0.0
    %v65 = vand.u32 %v41, 4294901760
    %66 = vmatpush1.xpose.msra.mxu0 %v65
    %67 = vmatprep.subr.mxu0 0.0
    %v68 = vand.u32 %v44, 4294901760
    %69 = vmatpush1.xpose.msra.mxu0 %v68
    %70 = vmatprep.subr.mxu0 0.0
    %v71 = vand.u32 %v47, 4294901760
    %72 = vmatpush1.xpose.msra.mxu0 %v71
    %73 = vmatprep.subr.mxu0 0.0
    %v74 = vand.u32 %v50, 4294901760
    %75 = vmatpush1.xpose.msra.mxu0 %v74
    %76 = vmatprep.subr.mxu0 0.0
    %v77 = vand.u32 %v53, 4294901760
    %78 = vmatpush1.xpose.msra.mxu0 %v77
    %79 = vmatprep.subr.mxu0 0.0
    %80 = vmatpush1.xpose.msra.mxu0 0.0
    %81 = vmatprep.subr.mxu0 0.0
    %82 = vmatpush1.xpose.msra.mxu0 0.0
    %83 = vmatprep.subr.mxu0 0.0
    %84 = vmatpush1.xpose.msra.mxu0 0.0
    %85 = vmatprep.subr.mxu0 0.0
    %86 = vmatpush1.xpose.msra.mxu0 0.0
    %87 = vmatprep.subr.mxu0 0.0
    %88 = vmatpush1.xpose.msra.mxu0 0.0
    %89 = vmatprep.subr.mxu0 0.0
    %90 = vmatpush1.xpose.msra.mxu0 0.0
    %91 = vmatprep.subr.mxu0 0.0
    %92 = vmatpush1.xpose.msra.mxu0 0.0
    %93 = vmatprep.subr.mxu0 0.0
    %94 = vmatpush1.xpose.msra.mxu0 0.0
    %95 = vmatprep.subr.mxu0 0.0
    %96 = vmatpush1.xpose.msra.mxu0 0.0
    %97 = vmatprep.subr.mxu0 0.0
    %98 = vmatpush1.xpose.msra.mxu0 0.0
    %99 = vmatprep.subr.mxu0 0.0
    %100 = vmatpush1.xpose.msra.mxu0 0.0
    %101 = vmatprep.subr.mxu0 0.0
    %102 = vmatpush1.xpose.msra.mxu0 0.0
    %103 = vmatprep.subr.mxu0 0.0
    %104 = vmatpush1.xpose.msra.mxu0 0.0
    %105 = vmatprep.subr.mxu0 0.0
    %106 = vmatpush1.xpose.msra.mxu0 0.0
    %107 = vmatprep.subr.mxu0 0.0
    %108 = vmatpush1.xpose.msra.mxu0 0.0
    %109 = vmatprep.subr.mxu0 0.0
    %110 = vmatpush1.xpose.msra.mxu0 0.0
    %111 = vmatprep.subr.mxu0 0.0
    %112 = vmatpush1.xpose.msra.mxu0 0.0
    %113 = vmatprep.subr.mxu0 0.0
    %114 = vmatpush1.xpose.msra.mxu0 0.0
    %115 = vmatprep.subr.mxu0 0.0
    %116 = vmatpush1.xpose.msra.mxu0 0.0
    %117 = vmatprep.subr.mxu0 0.0
    %118 = vmatpush1.xpose.msra.mxu0 0.0
    %119 = vmatprep.subr.mxu0 0.0
    %120 = vmatpush1.xpose.msra.mxu0 0.0
    %121 = vmatprep.subr.mxu0 0.0
    %122 = vmatpush1.xpose.msra.mxu0 0.0
    %123 = vmatprep.subr.mxu0 0.0
    %124 = vmatpush1.xpose.msra.mxu0 0.0
    %125 = vmatprep.subr.mxu0 0.0
    %126 = vmatpush1.xpose.msra.mxu0 0.0
    %127 = vmatprep.mubr.f32.mxu0 0.0
    %v128 = vand.u32 %v29, 4294901760
    %v129 = vsub.f32 %v29, %v128
    %v130 = vand.u32 %v129, 4294901760
    %v131 = vsub.f32 %v129, %v130
    %v132 = vand.u32 %v131, 4294901760
    %133 = vmatmul.mubr.f32.gmra.mrb[0].mxu0 %v132
    %v134 = vpop.f32.mrb[0].mxu0
    %v135 = vadd.f32 0.0, %v134
    %v136 = vpop.f32.mrb[0].mxu0
    %137 = vdwg.mxu0
    %138 = vmatprep.subr.mxu0 0.0
    %v139 = vand.u32 %v32, 4294901760
    %v140 = vsub.f32 %v32, %v139
    %v141 = vand.u32 %v140, 4294901760
    %v142 = vsub.f32 %v140, %v141
    %v143 = vand.u32 %v142, 4294901760
    %144 = vmatpush1.xpose.msra.mxu0 %v143
    %145 = vmatprep.subr.mxu0 0.0
    %v146 = vand.u32 %v35, 4294901760
    %v147 = vsub.f32 %v35, %v146
    %v148 = vand.u32 %v147, 4294901760
    %v149 = vsub.f32 %v147, %v148
    %v150 = vand.u32 %v149, 4294901760
    %151 = vmatpush1.xpose.msra.mxu0 %v150
    %152 = vmatprep.subr.mxu0 0.0
    %v153 = vand.u32 %v38, 4294901760
    %v154 = vsub.f32 %v38, %v153
    %v155 = vand.u32 %v154, 4294901760
    %v156 = vsub.f32 %v154, %v155
    %v157 = vand.u32 %v156, 4294901760
    %158 = vmatpush1.xpose.msra.mxu0 %v157
    %159 = vmatprep.subr.mxu0 0.0
    %v160 = vand.u32 %v41, 4294901760
    %v161 = vsub.f32 %v41, %v160
    %v162 = vand.u32 %v161, 4294901760
    %v163 = vsub.f32 %v161, %v162
    %v164 = vand.u32 %v163, 4294901760
    %165 = vmatpush1.xpose.msra.mxu0 %v164
    %166 = vmatprep.subr.mxu0 0.0
    %v167 = vand.u32 %v44, 4294901760
    %v168 = vsub.f32 %v44, %v167
    %v169 = vand.u32 %v168, 4294901760
    %v170 = vsub.f32 %v168, %v169
    %v171 = vand.u32 %v170, 4294901760
    %172 = vmatpush1.xpose.msra.mxu0 %v171
    %173 = vmatprep.subr.mxu0 0.0
    %v174 = vand.u32 %v47, 4294901760
    %v175 = vsub.f32 %v47, %v174
    %v176 = vand.u32 %v175, 4294901760
    %v177 = vsub.f32 %v175, %v176
    %v178 = vand.u32 %v177, 4294901760
    %179 = vmatpush1.xpose.msra.mxu0 %v178
    %180 = vmatprep.subr.mxu0 0.0
    %v181 = vand.u32 %v50, 4294901760
    %v182 = vsub.f32 %v50, %v181
    %v183 = vand.u32 %v182, 4294901760
    %v184 = vsub.f32 %v182, %v183
    %v185 = vand.u32 %v184, 4294901760
    %186 = vmatpush1.xpose.msra.mxu0 %v185
    %187 = vmatprep.subr.mxu0 0.0
    %v188 = vand.u32 %v53, 4294901760
    %v189 = vsub.f32 %v53, %v188
    %v190 = vand.u32 %v189, 4294901760
    %v191 = vsub.f32 %v189, %v190
    %v192 = vand.u32 %v191, 4294901760
    %193 = vmatpush1.xpose.msra.mxu0 %v192
    %194 = vmatprep.subr.mxu0 0.0
    %195 = vmatpush1.xpose.msra.mxu0 0.0
    %196 = vmatprep.subr.mxu0 0.0
    %197 = vmatpush1.xpose.msra.mxu0 0.0
    %198 = vmatprep.subr.mxu0 0.0
    %199 = vmatpush1.xpose.msra.mxu0 0.0
    %200 = vmatprep.subr.mxu0 0.0
    %201 = vmatpush1.xpose.msra.mxu0 0.0
    %202 = vmatprep.subr.mxu0 0.0
    %203 = vmatpush1.xpose.msra.mxu0 0.0
    %204 = vmatprep.subr.mxu0 0.0
    %205 = vmatpush1.xpose.msra.mxu0 0.0
    %206 = vmatprep.subr.mxu0 0.0
    %207 = vmatpush1.xpose.msra.mxu0 0.0
    %208 = vmatprep.subr.mxu0 0.0
    %209 = vmatpush1.xpose.msra.mxu0 0.0
    %210 = vmatprep.subr.mxu0 0.0
    %211 = vmatpush1.xpose.msra.mxu0 0.0
    %212 = vmatprep.subr.mxu0 0.0
    %213 = vmatpush1.xpose.msra.mxu0 0.0
    %214 = vmatprep.subr.mxu0 0.0
    %215 = vmatpush1.xpose.msra.mxu0 0.0
    %216 = vmatprep.subr.mxu0 0.0
    %217 = vmatpush1.xpose.msra.mxu0 0.0
    %218 = vmatprep.subr.mxu0 0.0
    %219 = vmatpush1.xpose.msra.mxu0 0.0
    %220 = vmatprep.subr.mxu0 0.0
    %221 = vmatpush1.xpose.msra.mxu0 0.0
    %222 = vmatprep.subr.mxu0 0.0
    %223 = vmatpush1.xpose.msra.mxu0 0.0
    %224 = vmatprep.subr.mxu0 0.0
    %225 = vmatpush1.xpose.msra.mxu0 0.0
    %226 = vmatprep.subr.mxu0 0.0
    %227 = vmatpush1.xpose.msra.mxu0 0.0
    %228 = vmatprep.subr.mxu0 0.0
    %229 = vmatpush1.xpose.msra.mxu0 0.0
    %230 = vmatprep.subr.mxu0 0.0
    %231 = vmatpush1.xpose.msra.mxu0 0.0
    %232 = vmatprep.subr.mxu0 0.0
    %233 = vmatpush1.xpose.msra.mxu0 0.0
    %234 = vmatprep.subr.mxu0 0.0
    %235 = vmatpush1.xpose.msra.mxu0 0.0
    %236 = vmatprep.subr.mxu0 0.0
    %237 = vmatpush1.xpose.msra.mxu0 0.0
    %238 = vmatprep.subr.mxu0 0.0
    %239 = vmatpush1.xpose.msra.mxu0 0.0
    %240 = vmatprep.subr.mxu0 0.0
    %241 = vmatpush1.xpose.msra.mxu0 0.0
    %242 = vmatprep.mubr.f32.mxu0 0.0
    %v243 = vand.u32 %v29, 4294901760
    %244 = vmatmul.mubr.f32.gmra.mrb[0].mxu0 %v243
    %v245 = vpop.f32.mrb[0].mxu0
    %v246 = vadd.f32 %v135, %v245
    %v247 = vpop.f32.mrb[0].mxu0
    %248 = vdwg.mxu0
    %249 = vmatprep.subr.mxu0 0.0
    %v250 = vand.u32 %v32, 4294901760
    %v251 = vsub.f32 %v32, %v250
    %252 = vmatpush1.xpose.msra.mxu0 %v251
    %253 = vmatprep.subr.mxu0 0.0
    %v254 = vand.u32 %v35, 4294901760
    %v255 = vsub.f32 %v35, %v254
    %256 = vmatpush1.xpose.msra.mxu0 %v255
    %257 = vmatprep.subr.mxu0 0.0
    %v258 = vand.u32 %v38, 4294901760
    %v259 = vsub.f32 %v38, %v258
    %260 = vmatpush1.xpose.msra.mxu0 %v259
    %261 = vmatprep.subr.mxu0 0.0
    %v262 = vand.u32 %v41, 4294901760
    %v263 = vsub.f32 %v41, %v262
    %264 = vmatpush1.xpose.msra.mxu0 %v263
    %265 = vmatprep.subr.mxu0 0.0
    %v266 = vand.u32 %v44, 4294901760
    %v267 = vsub.f32 %v44, %v266
    %268 = vmatpush1.xpose.msra.mxu0 %v267
    %269 = vmatprep.subr.mxu0 0.0
    %v270 = vand.u32 %v47, 4294901760
    %v271 = vsub.f32 %v47, %v270
    %272 = vmatpush1.xpose.msra.mxu0 %v271
    %273 = vmatprep.subr.mxu0 0.0
    %v274 = vand.u32 %v50, 4294901760
    %v275 = vsub.f32 %v50, %v274
    %276 = vmatpush1.xpose.msra.mxu0 %v275
    %277 = vmatprep.subr.mxu0 0.0
    %v278 = vand.u32 %v53, 4294901760
    %v279 = vsub.f32 %v53, %v278
    %280 = vmatpush1.xpose.msra.mxu0 %v279
    %281 = vmatprep.subr.mxu0 0.0
    %282 = vmatpush1.xpose.msra.mxu0 0.0
    %283 = vmatprep.subr.mxu0 0.0
    %284 = vmatpush1.xpose.msra.mxu0 0.0
    %285 = vmatprep.subr.mxu0 0.0
    %286 = vmatpush1.xpose.msra.mxu0 0.0
    %287 = vmatprep.subr.mxu0 0.0
    %288 = vmatpush1.xpose.msra.mxu0 0.0
    %289 = vmatprep.subr.mxu0 0.0
    %290 = vmatpush1.xpose.msra.mxu0 0.0
    %291 = vmatprep.subr.mxu0 0.0
    %292 = vmatpush1.xpose.msra.mxu0 0.0
    %293 = vmatprep.subr.mxu0 0.0
    %294 = vmatpush1.xpose.msra.mxu0 0.0
    %295 = vmatprep.subr.mxu0 0.0
    %296 = vmatpush1.xpose.msra.mxu0 0.0
    %297 = vmatprep.subr.mxu0 0.0
    %298 = vmatpush1.xpose.msra.mxu0 0.0
    %299 = vmatprep.subr.mxu0 0.0
    %300 = vmatpush1.xpose.msra.mxu0 0.0
    %301 = vmatprep.subr.mxu0 0.0
    %302 = vmatpush1.xpose.msra.mxu0 0.0
    %303 = vmatprep.subr.mxu0 0.0
    %304 = vmatpush1.xpose.msra.mxu0 0.0
    %305 = vmatprep.subr.mxu0 0.0
    %306 = vmatpush1.xpose.msra.mxu0 0.0
    %307 = vmatprep.subr.mxu0 0.0
    %308 = vmatpush1.xpose.msra.mxu0 0.0
    %309 = vmatprep.subr.mxu0 0.0
    %310 = vmatpush1.xpose.msra.mxu0 0.0
    %311 = vmatprep.subr.mxu0 0.0
    %312 = vmatpush1.xpose.msra.mxu0 0.0
    %313 = vmatprep.subr.mxu0 0.0
    %314 = vmatpush1.xpose.msra.mxu0 0.0
    %315 = vmatprep.subr.mxu0 0.0
    %316 = vmatpush1.xpose.msra.mxu0 0.0
    %317 = vmatprep.subr.mxu0 0.0
    %318 = vmatpush1.xpose.msra.mxu0 0.0
    %319 = vmatprep.subr.mxu0 0.0
    %320 = vmatpush1.xpose.msra.mxu0 0.0
    %321 = vmatprep.subr.mxu0 0.0
    %322 = vmatpush1.xpose.msra.mxu0 0.0
    %323 = vmatprep.subr.mxu0 0.0
    %324 = vmatpush1.xpose.msra.mxu0 0.0
    %325 = vmatprep.subr.mxu0 0.0
    %326 = vmatpush1.xpose.msra.mxu0 0.0
    %327 = vmatprep.subr.mxu0 0.0
    %328 = vmatpush1.xpose.msra.mxu0 0.0
    %329 = vmatprep.mubr.f32.mxu0 0.0
    %v330 = vand.u32 %v29, 4294901760
    %v331 = vsub.f32 %v29, %v330
    %332 = vmatmul.mubr.f32.gmra.mrb[0].mxu0 %v331
    %v333 = vpop.f32.mrb[0].mxu0
    %v334 = vadd.f32 %v246, %v333
    %v335 = vpop.f32.mrb[0].mxu0
    %336 = vdwg.mxu0
    %337 = vmatprep.subr.mxu0 0.0
    %v338 = vand.u32 %v32, 4294901760
    %339 = vmatpush1.xpose.msra.mxu0 %v338
    %340 = vmatprep.subr.mxu0 0.0
    %v341 = vand.u32 %v35, 4294901760
    %342 = vmatpush1.xpose.msra.mxu0 %v341
    %343 = vmatprep.subr.mxu0 0.0
    %v344 = vand.u32 %v38, 4294901760
    %345 = vmatpush1.xpose.msra.mxu0 %v344
    %346 = vmatprep.subr.mxu0 0.0
    %v347 = vand.u32 %v41, 4294901760
    %348 = vmatpush1.xpose.msra.mxu0 %v347
    %349 = vmatprep.subr.mxu0 0.0
    %v350 = vand.u32 %v44, 4294901760
    %351 = vmatpush1.xpose.msra.mxu0 %v350
    %352 = vmatprep.subr.mxu0 0.0
    %v353 = vand.u32 %v47, 4294901760
    %354 = vmatpush1.xpose.msra.mxu0 %v353
    %355 = vmatprep.subr.mxu0 0.0
    %v356 = vand.u32 %v50, 4294901760
    %357 = vmatpush1.xpose.msra.mxu0 %v356
    %358 = vmatprep.subr.mxu0 0.0
    %v359 = vand.u32 %v53, 4294901760
    %360 = vmatpush1.xpose.msra.mxu0 %v359
    %361 = vmatprep.subr.mxu0 0.0
    %362 = vmatpush1.xpose.msra.mxu0 0.0
    %363 = vmatprep.subr.mxu0 0.0
    %364 = vmatpush1.xpose.msra.mxu0 0.0
    %365 = vmatprep.subr.mxu0 0.0
    %366 = vmatpush1.xpose.msra.mxu0 0.0
    %367 = vmatprep.subr.mxu0 0.0
    %368 = vmatpush1.xpose.msra.mxu0 0.0
    %369 = vmatprep.subr.mxu0 0.0
    %370 = vmatpush1.xpose.msra.mxu0 0.0
    %371 = vmatprep.subr.mxu0 0.0
    %372 = vmatpush1.xpose.msra.mxu0 0.0
    %373 = vmatprep.subr.mxu0 0.0
    %374 = vmatpush1.xpose.msra.mxu0 0.0
    %375 = vmatprep.subr.mxu0 0.0
    %376 = vmatpush1.xpose.msra.mxu0 0.0
    %377 = vmatprep.subr.mxu0 0.0
    %378 = vmatpush1.xpose.msra.mxu0 0.0
    %379 = vmatprep.subr.mxu0 0.0
    %380 = vmatpush1.xpose.msra.mxu0 0.0
    %381 = vmatprep.subr.mxu0 0.0
    %382 = vmatpush1.xpose.msra.mxu0 0.0
    %383 = vmatprep.subr.mxu0 0.0
    %384 = vmatpush1.xpose.msra.mxu0 0.0
    %385 = vmatprep.subr.mxu0 0.0
    %386 = vmatpush1.xpose.msra.mxu0 0.0
    %387 = vmatprep.subr.mxu0 0.0
    %388 = vmatpush1.xpose.msra.mxu0 0.0
    %389 = vmatprep.subr.mxu0 0.0
    %390 = vmatpush1.xpose.msra.mxu0 0.0
    %391 = vmatprep.subr.mxu0 0.0
    %392 = vmatpush1.xpose.msra.mxu0 0.0
    %393 = vmatprep.subr.mxu0 0.0
    %394 = vmatpush1.xpose.msra.mxu0 0.0
    %395 = vmatprep.subr.mxu0 0.0
    %396 = vmatpush1.xpose.msra.mxu0 0.0
    %397 = vmatprep.subr.mxu0 0.0
    %398 = vmatpush1.xpose.msra.mxu0 0.0
    %399 = vmatprep.subr.mxu0 0.0
    %400 = vmatpush1.xpose.msra.mxu0 0.0
    %401 = vmatprep.subr.mxu0 0.0
    %402 = vmatpush1.xpose.msra.mxu0 0.0
    %403 = vmatprep.subr.mxu0 0.0
    %404 = vmatpush1.xpose.msra.mxu0 0.0
    %405 = vmatprep.subr.mxu0 0.0
    %406 = vmatpush1.xpose.msra.mxu0 0.0
    %407 = vmatprep.subr.mxu0 0.0
    %408 = vmatpush1.xpose.msra.mxu0 0.0
    %409 = vmatprep.mubr.f32.mxu0 0.0
    %v410 = vand.u32 %v29, 4294901760
    %v411 = vsub.f32 %v29, %v410
    %v412 = vand.u32 %v411, 4294901760
    %413 = vmatmul.mubr.f32.gmra.mrb[0].mxu0 %v412
    %v414 = vpop.f32.mrb[0].mxu0
    %v415 = vadd.f32 %v334, %v414
    %v416 = vpop.f32.mrb[0].mxu0
    %417 = vdwg.mxu0
    %418 = vmatprep.subr.mxu0 0.0
    %v419 = vand.u32 %v32, 4294901760
    %v420 = vsub.f32 %v32, %v419
    %v421 = vand.u32 %v420, 4294901760
    %422 = vmatpush1.xpose.msra.mxu0 %v421
    %423 = vmatprep.subr.mxu0 0.0
    %v424 = vand.u32 %v35, 4294901760
    %v425 = vsub.f32 %v35, %v424
    %v426 = vand.u32 %v425, 4294901760
    %427 = vmatpush1.xpose.msra.mxu0 %v426
    %428 = vmatprep.subr.mxu0 0.0
    %v429 = vand.u32 %v38, 4294901760
    %v430 = vsub.f32 %v38, %v429
    %v431 = vand.u32 %v430, 4294901760
    %432 = vmatpush1.xpose.msra.mxu0 %v431
    %433 = vmatprep.subr.mxu0 0.0
    %v434 = vand.u32 %v41, 4294901760
    %v435 = vsub.f32 %v41, %v434
    %v436 = vand.u32 %v435, 4294901760
    %437 = vmatpush1.xpose.msra.mxu0 %v436
    %438 = vmatprep.subr.mxu0 0.0
    %v439 = vand.u32 %v44, 4294901760
    %v440 = vsub.f32 %v44, %v439
    %v441 = vand.u32 %v440, 4294901760
    %442 = vmatpush1.xpose.msra.mxu0 %v441
    %443 = vmatprep.subr.mxu0 0.0
    %v444 = vand.u32 %v47, 4294901760
    %v445 = vsub.f32 %v47, %v444
    %v446 = vand.u32 %v445, 4294901760
    %447 = vmatpush1.xpose.msra.mxu0 %v446
    %448 = vmatprep.subr.mxu0 0.0
    %v449 = vand.u32 %v50, 4294901760
    %v450 = vsub.f32 %v50, %v449
    %v451 = vand.u32 %v450, 4294901760
    %452 = vmatpush1.xpose.msra.mxu0 %v451
    %453 = vmatprep.subr.mxu0 0.0
    %v454 = vand.u32 %v53, 4294901760
    %v455 = vsub.f32 %v53, %v454
    %v456 = vand.u32 %v455, 4294901760
    %457 = vmatpush1.xpose.msra.mxu0 %v456
    %458 = vmatprep.subr.mxu0 0.0
    %459 = vmatpush1.xpose.msra.mxu0 0.0
    %460 = vmatprep.subr.mxu0 0.0
    %461 = vmatpush1.xpose.msra.mxu0 0.0
    %462 = vmatprep.subr.mxu0 0.0
    %463 = vmatpush1.xpose.msra.mxu0 0.0
    %464 = vmatprep.subr.mxu0 0.0
    %465 = vmatpush1.xpose.msra.mxu0 0.0
    %466 = vmatprep.subr.mxu0 0.0
    %467 = vmatpush1.xpose.msra.mxu0 0.0
    %468 = vmatprep.subr.mxu0 0.0
    %469 = vmatpush1.xpose.msra.mxu0 0.0
    %470 = vmatprep.subr.mxu0 0.0
    %471 = vmatpush1.xpose.msra.mxu0 0.0
    %472 = vmatprep.subr.mxu0 0.0
    %473 = vmatpush1.xpose.msra.mxu0 0.0
    %474 = vmatprep.subr.mxu0 0.0
    %475 = vmatpush1.xpose.msra.mxu0 0.0
    %476 = vmatprep.subr.mxu0 0.0
    %477 = vmatpush1.xpose.msra.mxu0 0.0
    %478 = vmatprep.subr.mxu0 0.0
    %479 = vmatpush1.xpose.msra.mxu0 0.0
    %480 = vmatprep.subr.mxu0 0.0
    %481 = vmatpush1.xpose.msra.mxu0 0.0
    %482 = vmatprep.subr.mxu0 0.0
    %483 = vmatpush1.xpose.msra.mxu0 0.0
    %484 = vmatprep.subr.mxu0 0.0
    %485 = vmatpush1.xpose.msra.mxu0 0.0
    %486 = vmatprep.subr.mxu0 0.0
    %487 = vmatpush1.xpose.msra.mxu0 0.0
    %488 = vmatprep.subr.mxu0 0.0
    %489 = vmatpush1.xpose.msra.mxu0 0.0
    %490 = vmatprep.subr.mxu0 0.0
    %491 = vmatpush1.xpose.msra.mxu0 0.0
    %492 = vmatprep.subr.mxu0 0.0
    %493 = vmatpush1.xpose.msra.mxu0 0.0
    %494 = vmatprep.subr.mxu0 0.0
    %495 = vmatpush1.xpose.msra.mxu0 0.0
    %496 = vmatprep.subr.mxu0 0.0
    %497 = vmatpush1.xpose.msra.mxu0 0.0
    %498 = vmatprep.subr.mxu0 0.0
    %499 = vmatpush1.xpose.msra.mxu0 0.0
    %500 = vmatprep.subr.mxu0 0.0
    %501 = vmatpush1.xpose.msra.mxu0 0.0
    %502 = vmatprep.subr.mxu0 0.0
    %503 = vmatpush1.xpose.msra.mxu0 0.0
    %504 = vmatprep.subr.mxu0 0.0
    %505 = vmatpush1.xpose.msra.mxu0 0.0
    %506 = vmatprep.mubr.f32.mxu0 0.0
    %v507 = vand.u32 %v29, 4294901760
    %508 = vmatmul.mubr.f32.gmra.mrb[0].mxu0 %v507
    %v509 = vpop.f32.mrb[0].mxu0
    %v510 = vadd.f32 %v415, %v509
    %v511 = vpop.f32.mrb[0].mxu0
    %512 = vdwg.mxu0
    %513 = vmatprep.subr.mxu0 0.0
    %v514 = vand.u32 %v32, 4294901760
    %515 = vmatpush1.xpose.msra.mxu0 %v514
    %516 = vmatprep.subr.mxu0 0.0
    %v517 = vand.u32 %v35, 4294901760
    %518 = vmatpush1.xpose.msra.mxu0 %v517
    %519 = vmatprep.subr.mxu0 0.0
    %v520 = vand.u32 %v38, 4294901760
    %521 = vmatpush1.xpose.msra.mxu0 %v520
    %522 = vmatprep.subr.mxu0 0.0
    %v523 = vand.u32 %v41, 4294901760
    %524 = vmatpush1.xpose.msra.mxu0 %v523
    %525 = vmatprep.subr.mxu0 0.0
    %v526 = vand.u32 %v44, 4294901760
    %527 = vmatpush1.xpose.msra.mxu0 %v526
    %528 = vmatprep.subr.mxu0 0.0
    %v529 = vand.u32 %v47, 4294901760
    %530 = vmatpush1.xpose.msra.mxu0 %v529
    %531 = vmatprep.subr.mxu0 0.0
    %v532 = vand.u32 %v50, 4294901760
    %533 = vmatpush1.xpose.msra.mxu0 %v532
    %534 = vmatprep.subr.mxu0 0.0
    %v535 = vand.u32 %v53, 4294901760
    %536 = vmatpush1.xpose.msra.mxu0 %v535
    %537 = vmatprep.subr.mxu0 0.0
    %538 = vmatpush1.xpose.msra.mxu0 0.0
    %539 = vmatprep.subr.mxu0 0.0
    %540 = vmatpush1.xpose.msra.mxu0 0.0
    %541 = vmatprep.subr.mxu0 0.0
    %542 = vmatpush1.xpose.msra.mxu0 0.0
    %543 = vmatprep.subr.mxu0 0.0
    %544 = vmatpush1.xpose.msra.mxu0 0.0
    %545 = vmatprep.subr.mxu0 0.0
    %546 = vmatpush1.xpose.msra.mxu0 0.0
    %547 = vmatprep.subr.mxu0 0.0
    %548 = vmatpush1.xpose.msra.mxu0 0.0
    %549 = vmatprep.subr.mxu0 0.0
    %550 = vmatpush1.xpose.msra.mxu0 0.0
    %551 = vmatprep.subr.mxu0 0.0
    %552 = vmatpush1.xpose.msra.mxu0 0.0
    %553 = vmatprep.subr.mxu0 0.0
    %554 = vmatpush1.xpose.msra.mxu0 0.0
    %555 = vmatprep.subr.mxu0 0.0
    %556 = vmatpush1.xpose.msra.mxu0 0.0
    %557 = vmatprep.subr.mxu0 0.0
    %558 = vmatpush1.xpose.msra.mxu0 0.0
    %559 = vmatprep.subr.mxu0 0.0
    %560 = vmatpush1.xpose.msra.mxu0 0.0
    %561 = vmatprep.subr.mxu0 0.0
    %562 = vmatpush1.xpose.msra.mxu0 0.0
    %563 = vmatprep.subr.mxu0 0.0
    %564 = vmatpush1.xpose.msra.mxu0 0.0
    %565 = vmatprep.subr.mxu0 0.0
    %566 = vmatpush1.xpose.msra.mxu0 0.0
    %567 = vmatprep.subr.mxu0 0.0
    %568 = vmatpush1.xpose.msra.mxu0 0.0
    %569 = vmatprep.subr.mxu0 0.0
    %570 = vmatpush1.xpose.msra.mxu0 0.0
    %571 = vmatprep.subr.mxu0 0.0
    %572 = vmatpush1.xpose.msra.mxu0 0.0
    %573 = vmatprep.subr.mxu0 0.0
    %574 = vmatpush1.xpose.msra.mxu0 0.0
    %575 = vmatprep.subr.mxu0 0.0
    %576 = vmatpush1.xpose.msra.mxu0 0.0
    %577 = vmatprep.subr.mxu0 0.0
    %578 = vmatpush1.xpose.msra.mxu0 0.0
    %579 = vmatprep.subr.mxu0 0.0
    %580 = vmatpush1.xpose.msra.mxu0 0.0
    %581 = vmatprep.subr.mxu0 0.0
    %582 = vmatpush1.xpose.msra.mxu0 0.0
    %583 = vmatprep.subr.mxu0 0.0
    %584 = vmatpush1.xpose.msra.mxu0 0.0
    %585 = vmatprep.mubr.f32.mxu0 0.0
    %v586 = vand.u32 %v29, 4294901760
    %587 = vmatmul.mubr.f32.gmra.mrb[0].mxu0 %v586
    %v588 = vpop.f32.mrb[0].mxu0
    %v589 = vadd.f32 %v510, %v588
    %v590 = vpop.f32.mrb[0].mxu0
    %591 = vdwg.mxu0
    %v592 = vlaneseq
    %v593 = vand.u32 %v592, 127
    %v594 = vld [vmem:[%s2] sm:$0xff]
    %v595 = vld [vmem:[%s2 + $0x8] sm:$0xff]
    %596 = vset.pattern.permute.xlu0 0
    %597 = vperm.xlu0 %596, %v594
    %v598 = vpop.permute.xlu0 %597
    %599 = vset.pattern.permute.xlu0 0
    %600 = vperm.xlu0 %599, %v595
    %v601 = vpop.permute.xlu0 %600
    %vm602 = vcmp.eq.s32.totalorder %v598, %v593
    %vm603 = vcmp.eq.s32.totalorder %v601, %v593
    %v604 = vsel %vm602, 1, 0
    %v605 = vsel %vm603, 1, 0
    %vm606 = vcmask 523264
    %v607 = vsel %vm606, %v604, 0
    %v608 = vrot.slane %v607, 4
    %v609 = vadd.s32 %v607, %v608
    %v610 = vrot.slane %v609, 2
    %v611 = vadd.s32 %v609, %v610
    %v612 = vrot.slane %v611, 1
    %v613 = vadd.s32 %v611, %v612
    %v614 = vsel %vm606, %v605, 0
    %v615 = vrot.slane %v614, 4
    %v616 = vadd.s32 %v614, %v615
    %v617 = vrot.slane %v616, 2
    %v618 = vadd.s32 %v616, %v617
    %v619 = vrot.slane %v618, 1
    %v620 = vadd.s32 %v618, %v619
    %v621 = vld [vmem:[%s3] sm:$0xff]
    %v622 = vld [vmem:[%s3 + $0x8] sm:$0xff]
    %v623 = vld [vmem:[%s3 + $0x10] sm:$0xff]
    %v624 = vld [vmem:[%s3 + $0x18] sm:$0xff]
    %v625 = vld [vmem:[%s3 + $0x20] sm:$0xff]
    %v626 = vld [vmem:[%s3 + $0x28] sm:$0xff]
    %v627 = vld [vmem:[%s3 + $0x30] sm:$0xff]
    %v628 = vld [vmem:[%s3 + $0x38] sm:$0xff]
    %v629 = vld [vmem:[%s3 + $0x40] sm:$0xff]
    %v630 = vld [vmem:[%s3 + $0x48] sm:$0xff]
    %v631 = vld [vmem:[%s3 + $0x50] sm:$0xff]
    %v632 = vld [vmem:[%s3 + $0x58] sm:$0xff]
    %v633 = vld [vmem:[%s3 + $0x60] sm:$0xff]
    %v634 = vld [vmem:[%s3 + $0x68] sm:$0xff]
    %v635 = vld [vmem:[%s3 + $0x70] sm:$0xff]
    %v636 = vld [vmem:[%s3 + $0x78] sm:$0xff]
    %v637 = vld [vmem:[%s3 + $0x80] sm:$0xff]
    %v638 = vld [vmem:[%s3 + $0x88] sm:$0xff]
    %v639 = vld [vmem:[%s3 + $0x90] sm:$0xff]
    %v640 = vld [vmem:[%s3 + $0x98] sm:$0xff]
    %641 = vset.pattern.permute.xlu0 0
    %642 = vperm.xlu0 %641, %v621
    %v643 = vpop.permute.xlu0 %642
    %644 = vset.pattern.permute.xlu0 0
    %645 = vperm.xlu0 %644, %v622
    %v646 = vpop.permute.xlu0 %645
    %647 = vset.pattern.permute.xlu0 0
    %648 = vperm.xlu0 %647, %v623
    %v649 = vpop.permute.xlu0 %648
    %650 = vset.pattern.permute.xlu0 0
    %651 = vperm.xlu0 %650, %v624
    %v652 = vpop.permute.xlu0 %651
    %653 = vset.pattern.permute.xlu0 0
    %654 = vperm.xlu0 %653, %v625
    %v655 = vpop.permute.xlu0 %654
    %656 = vset.pattern.permute.xlu0 0
    %657 = vperm.xlu0 %656, %v626
    %v658 = vpop.permute.xlu0 %657
    %659 = vset.pattern.permute.xlu0 0
    %660 = vperm.xlu0 %659, %v627
    %v661 = vpop.permute.xlu0 %660
    %662 = vset.pattern.permute.xlu0 0
    %663 = vperm.xlu0 %662, %v628
    %v664 = vpop.permute.xlu0 %663
    %665 = vset.pattern.permute.xlu0 0
    %666 = vperm.xlu0 %665, %v629
    %v667 = vpop.permute.xlu0 %666
    %668 = vset.pattern.permute.xlu0 0
    %669 = vperm.xlu0 %668, %v630
    %v670 = vpop.permute.xlu0 %669
    %671 = vset.pattern.permute.xlu0 0
    %672 = vperm.xlu0 %671, %v631
    %v673 = vpop.permute.xlu0 %672
    %674 = vset.pattern.permute.xlu0 0
    %675 = vperm.xlu0 %674, %v632
    %v676 = vpop.permute.xlu0 %675
    %677 = vset.pattern.permute.xlu0 0
    %678 = vperm.xlu0 %677, %v633
    %v679 = vpop.permute.xlu0 %678
    %680 = vset.pattern.permute.xlu0 0
    %681 = vperm.xlu0 %680, %v634
    %v682 = vpop.permute.xlu0 %681
    %683 = vset.pattern.permute.xlu0 0
    %684 = vperm.xlu0 %683, %v635
    %v685 = vpop.permute.xlu0 %684
    %686 = vset.pattern.permute.xlu0 0
    %687 = vperm.xlu0 %686, %v636
    %v688 = vpop.permute.xlu0 %687
    %689 = vset.pattern.permute.xlu0 0
    %690 = vperm.xlu0 %689, %v637
    %v691 = vpop.permute.xlu0 %690
    %692 = vset.pattern.permute.xlu0 0
    %693 = vperm.xlu0 %692, %v638
    %v694 = vpop.permute.xlu0 %693
    %695 = vset.pattern.permute.xlu0 0
    %696 = vperm.xlu0 %695, %v639
    %v697 = vpop.permute.xlu0 %696
    %698 = vset.pattern.permute.xlu0 0
    %699 = vperm.xlu0 %698, %v640
    %v700 = vpop.permute.xlu0 %699
    %vm701 = vcmp.eq.s32.totalorder %v643, %v593
    %vm702 = vcmp.eq.s32.totalorder %v646, %v593
    %vm703 = vcmp.eq.s32.totalorder %v649, %v593
    %vm704 = vcmp.eq.s32.totalorder %v652, %v593
    %vm705 = vcmp.eq.s32.totalorder %v655, %v593
    %vm706 = vcmp.eq.s32.totalorder %v658, %v593
    %vm707 = vcmp.eq.s32.totalorder %v661, %v593
    %vm708 = vcmp.eq.s32.totalorder %v664, %v593
    %vm709 = vcmp.eq.s32.totalorder %v667, %v593
    %vm710 = vcmp.eq.s32.totalorder %v670, %v593
    %vm711 = vcmp.eq.s32.totalorder %v673, %v593
    %vm712 = vcmp.eq.s32.totalorder %v676, %v593
    %vm713 = vcmp.eq.s32.totalorder %v679, %v593
    %vm714 = vcmp.eq.s32.totalorder %v682, %v593
    %vm715 = vcmp.eq.s32.totalorder %v685, %v593
    %vm716 = vcmp.eq.s32.totalorder %v688, %v593
    %vm717 = vcmp.eq.s32.totalorder %v691, %v593
    %vm718 = vcmp.eq.s32.totalorder %v694, %v593
    %vm719 = vcmp.eq.s32.totalorder %v697, %v593
    %vm720 = vcmp.eq.s32.totalorder %v700, %v593
    %v721 = vsel %vm701, 1, 0
    %v722 = vsel %vm702, 1, 0
    %v723 = vsel %vm703, 1, 0
    %v724 = vsel %vm704, 1, 0
    %v725 = vsel %vm705, 1, 0
    %v726 = vsel %vm706, 1, 0
    %v727 = vsel %vm707, 1, 0
    %v728 = vsel %vm708, 1, 0
    %v729 = vsel %vm709, 1, 0
    %v730 = vsel %vm710, 1, 0
    %v731 = vsel %vm711, 1, 0
    %v732 = vsel %vm712, 1, 0
    %v733 = vsel %vm713, 1, 0
    %v734 = vsel %vm714, 1, 0
    %v735 = vsel %vm715, 1, 0
    %v736 = vsel %vm716, 1, 0
    %v737 = vsel %vm717, 1, 0
    %v738 = vsel %vm718, 1, 0
    %v739 = vsel %vm719, 1, 0
    %v740 = vsel %vm720, 1, 0
    %v741 = vsel %vm606, %v721, 0
    %v742 = vsel %vm606, %v722, 0
    %v743 = vsel %vm606, %v723, 0
    %v744 = vadd.s32 %v741, %v743
    %v745 = vsel %vm606, %v724, 0
    %v746 = vadd.s32 %v742, %v745
    %v747 = vsel %vm606, %v725, 0
    %v748 = vadd.s32 %v744, %v747
    %v749 = vsel %vm606, %v726, 0
    %v750 = vadd.s32 %v746, %v749
    %v751 = vsel %vm606, %v727, 0
    %v752 = vadd.s32 %v748, %v751
    %v753 = vsel %vm606, %v728, 0
    %v754 = vadd.s32 %v750, %v753
    %v755 = vsel %vm606, %v729, 0
    %v756 = vadd.s32 %v752, %v755
    %v757 = vsel %vm606, %v730, 0
    %v758 = vadd.s32 %v754, %v757
    %v759 = vadd.s32 %v756, %v758
    %v760 = vrot.slane %v759, 4
    %v761 = vadd.s32 %v759, %v760
    %v762 = vrot.slane %v761, 2
    %v763 = vadd.s32 %v761, %v762
    %v764 = vrot.slane %v763, 1
    %v765 = vadd.s32 %v763, %v764
    %v766 = vsel %vm606, %v731, 0
    %v767 = vsel %vm606, %v732, 0
    %v768 = vsel %vm606, %v733, 0
    %v769 = vadd.s32 %v766, %v768
    %v770 = vsel %vm606, %v734, 0
    %v771 = vadd.s32 %v767, %v770
    %v772 = vsel %vm606, %v735, 0
    %v773 = vadd.s32 %v769, %v772
    %v774 = vsel %vm606, %v736, 0
    %v775 = vadd.s32 %v771, %v774
    %v776 = vsel %vm606, %v737, 0
    %v777 = vadd.s32 %v773, %v776
    %v778 = vsel %vm606, %v738, 0
    %v779 = vadd.s32 %v775, %v778
    %v780 = vsel %vm606, %v739, 0
    %v781 = vadd.s32 %v777, %v780
    %v782 = vsel %vm606, %v740, 0
    %v783 = vadd.s32 %v779, %v782
    %v784 = vadd.s32 %v781, %v783
    %v785 = vrot.slane %v784, 4
    %v786 = vadd.s32 %v784, %v785
    %v787 = vrot.slane %v786, 2
    %v788 = vadd.s32 %v786, %v787
    %v789 = vrot.slane %v788, 1
    %v790 = vadd.s32 %v788, %v789
    %v791 = vmin.f32 %v589, 0.0
    %v792 = vand.u32 2147483647, %v589
    %v793 = vsub.f32 0.0, %v792
    %v794 = vmul.f32 %v793, 1.442695
    %v795 = vpow.pop %v794
    %v796 = vadd.f32 %v795, 1.0
    %v797 = vlog2.pop %v796
    %v798 = vmul.f32 %v797, 0.6931472
    %v799 = vmul.f32 -0.5, %v795
    %v800 = vadd.f32 %v799, 1.0
    %v801 = vmul.f32 %v800, %v795
    %v802 = vand.u32 2147483647, %v795
    %vm803 = vcmp.lt.f32.partialorder %v802, 0.0004427343
    %v804 = vsel %vm803, %v801, %v798
    %v805 = vsub.f32 %v791, %v804
    %v806 = vcvt.s32.f32 %v613
    %v807 = vcvt.s32.f32 %v620
    %v808 = vcvt.s32.f32 %v765
    %v809 = vcvt.s32.f32 %v790
    %v811 = vrot.slane %v589, 1
    %v814 = vmul.f32 %v808, %v589
    %v815 = vmul.f32 %v809, %v811
    %v816 = vadd.f32 %v806, %v808
    %v817 = vadd.f32 %v807, %v809
    %v819 = vrot.slane %v805, 1
    %v822 = vmul.f32 %v816, %v805
    %v823 = vmul.f32 %v817, %v819
    %v824 = vsub.f32 %v814, %v822
    %v825 = vsub.f32 %v815, %v823
    %v828 = vrot.slane %v825, 7
    %vm829 = vcmask 1041409
    %v830 = vsel %vm829, %v828, %v824
    %vm832 = vcmask 517120
    %v833 = vsel %vm832, %v830, 0.0
    %834 = vadd.xlane.f32.xlu0 %v833
    %v835 = vpop.xlane.xlu0 %834
    %836 = vst [vmem:[#allocation2] sm:$0x3] %v835
    // Predicated region
    $region18: #{tpu_custom_call.1} parent=1 // pred_check
      _
    $region19: #{tpu_custom_call.1} parent=1 // pred_check_branch
      %838 = sbr.rel (0) target = $region21
    $region20: #{tpu_custom_call.1} parent=1 // pred_region
      %s840 = ssub.s32 32, 32
      %841 = vsyncadd [#allocation3], %s840
      %s843 = sshll.u32 [#allocation2], 4
      %s844 = int_to_ptr.vmem [resolvable:$true] %s843
      %846 = dma.vmem_to_hbm [thread:$0]  %s844, 32, %s4, [#allocation3]
    $region21: #{tpu_custom_call.1} parent=1 // pred_fallthru
      _
    // Predicated region
    $region22: #{tpu_custom_call.1} parent=1 // pred_check
      _
    $region23: #{tpu_custom_call.1} parent=1 // pred_check_branch
      %848 = sbr.rel (0) target = $region25
    $region24: #{tpu_custom_call.1} parent=1 // pred_region
      %849 = dma.done [#allocation3], 32
    $region25: #{tpu_custom_call.1} parent=1 // pred_fallthru
      _
    %850 = vsyncpa [#allocation3], 1

</llo_original>
